<compile_context>
chip_gen: v7x
topology: tpu7x:2x2x1
jax: 0.10.0
libtpu: 0.0.40
codegen_flags: <defaults>
</compile_context>

<pallas_src>
import math

import numpy as np
import jax
import jax.numpy as jnp
from jax.experimental import pallas as pl
from jax.experimental.pallas import tpu as pltpu


# --------------------------------------------------------------------------
# Kernel
# --------------------------------------------------------------------------
def film_kernel(x_ref, cond_ref, w_ref, b_ref, o_ref):
    # One fused MXU matmul producing packed [gamma | beta]; f32 accumulation.
    gb = jnp.dot(cond_ref[...], w_ref[...],
                 preferred_element_type=jnp.float32) + b_ref[...]
    half = gb.shape[-1] // 2          # 128-lane-aligned column split (pack>1)
    gamma = gb[:, :half]              # the FiLM "+1" is folded into the bias
    beta = gb[:, half:]
    out = x_ref[...].astype(jnp.float32) * gamma + beta
    o_ref[...] = out.astype(o_ref.dtype)


# --------------------------------------------------------------------------
# Wrapper helpers
# --------------------------------------------------------------------------
def _round_up(x, m):
    return ((x + m - 1) // m) * m


def _cdiv(a, b):
    return -(-a // b)


def _sublane_rows(dtype):
    """Full-vreg sublane packing: 8 rows f32, 16 bf16, 32 int8."""
    return max(8, 32 // np.dtype(dtype).itemsize)


def _vmem_capacity_bytes():
    """Per-core VMEM capacity; falls back to the v7x-safe 64 MiB."""
    try:
        info = pltpu.get_tpu_info()
        cap = getattr(info, "vmem_capacity_bytes", None)
        if cap:
            return int(cap)
    except Exception:
        pass
    return 64 << 20


def _pack_factor(din, dout, w_itemsize, *, batch_hint=None, sub=8,
                 target_lanes=512, max_lanes=2048,
                 weight_budget=8 << 20, max_pack=64):
    """Batch rows packed per lane-row.

    p*Dout becomes a multiple of 128 (unmasked vst) and is grown toward
    `target_lanes` for fewer, larger DMAs, capped by the kron-inflated fused
    weight size (2*p^2*Din*Dout bytes), the batch size, and max_lanes.
    """
    base = 1 if dout % 128 == 0 else math.lcm(dout, 128) // dout

    def wbytes(p):
        return 2 * p * p * din * dout * w_itemsize

    if base > max_pack or wbytes(base) > weight_budget:
        # TODO(synk): odd Dout with a huge lcm (or huge Din*Dout) falls back to
        # un-packed masked stores; pad Dout to a multiple of 128 upstream for
        # the lane-dense path.
        return 1
    p = base
    while p * dout < target_lanes:
        cand = p + base                       # keeps cand*dout 128-aligned
        if cand > max_pack or cand * dout > max_lanes:
            break
        if wbytes(cand) > weight_budget:
            break
        if batch_hint is not None and cand > max(base, batch_hint // sub):
            break                             # don't pad tiny batches away
        p = cand
    return p


def _choose_block_rows(bp, sub, stream_row_bytes, resident_bytes, vmem_cap):
    """Largest sublane-aligned batch tile under a generation-aware VMEM budget."""
    usable = int(vmem_cap * 0.70)                   # headroom for Pallas internals
    stream_budget = max(usable - resident_bytes, 1 << 20)
    cap = stream_budget // max(stream_row_bytes, 1)
    cap = max(sub, (cap // sub) * sub)
    cap = min(cap, 1024)                            # diminishing returns past ~1k rows
    if bp > cap:
        return cap
    if bp >= 2 * sub:
        # Whole batch fits one tile: still emit >=2 grid steps so both
        # TensorCores get work on megacore parts (v7x); ~0.35us/step is noise.
        return min(_round_up(_cdiv(bp, 2), sub), cap)
    return min(_round_up(bp, sub), cap)


def _resident_spec(shape):
    """Grid-invariant operand: fetched once; single-buffered when supported."""
    index_map = lambda i: (0, 0)
    if hasattr(pl, "Buffered"):
        try:
            return pl.BlockSpec(shape, index_map, pipeline_mode=pl.Buffered(1))
        except (TypeError, ValueError):
            pass
    return pl.BlockSpec(shape, index_map)


# --------------------------------------------------------------------------
# Parameter preparation (hoist / cache this across forward calls)
# --------------------------------------------------------------------------
def prepare_film_params(wg, bg, wb, bb, *, pack=1, weight_dtype=jnp.float32):
    """Build the fused / packed FiLM parameters.

    Returns:
      w_cat: (pack*Din, 2*pack*Dout)  block-diagonal [Wg | Wb]
      b_cat: (1, 2*pack*Dout)         [bg + 1 | bb]  ("+1" folded into gamma bias)
    """
    dout, din = wg.shape
    wg_t = wg.T.astype(weight_dtype)          # (Din, Dout)
    wb_t = wb.T.astype(weight_dtype)
    if pack > 1:
        eye = jnp.eye(pack, dtype=weight_dtype)
        wg_t = jnp.kron(eye, wg_t)             # (p*Din, p*Dout) block-diagonal
        wb_t = jnp.kron(eye, wb_t)
    w_cat = jnp.concatenate([wg_t, wb_t], axis=1)          # (p*Din, 2*p*Dout)
    b_cat = jnp.concatenate(
        [jnp.tile(bg.astype(jnp.float32) + 1.0, pack),     # "+1" folded here
         jnp.tile(bb.astype(jnp.float32), pack)]).reshape(1, 2 * pack * dout)
    return w_cat, b_cat


# --------------------------------------------------------------------------
# Core pallas_call wrapper
# --------------------------------------------------------------------------
def _film_apply(x, conditional, w_cat, b_cat, pack, *, block_rows=None):
    B, dout = x.shape
    Bc, din = conditional.shape
    assert B == Bc, "x and conditional must share the batch dimension"
    assert w_cat.shape == (pack * din, 2 * pack * dout)

    p = pack
    sub = _sublane_rows(x.dtype)
    bp = _cdiv(B, p)                                  # packed rows of real data

    # ---- generation-aware VMEM accounting ---------------------------------
    x_row_b = p * dout * x.dtype.itemsize
    cond_row_b = p * din * conditional.dtype.itemsize
    stream_row_bytes = 2 * (2 * x_row_b + cond_row_b)          # x + out + cond, dbl-buffered
    resident_bytes = 2 * (w_cat.size * w_cat.dtype.itemsize    # conservative 2x even
                          + b_cat.size * b_cat.dtype.itemsize)  # with Buffered(1)
    vmem_cap = _vmem_capacity_bytes()

    if block_rows is None:
        block_rows = _choose_block_rows(bp, sub, stream_row_bytes,
                                        resident_bytes, vmem_cap)
    block_rows = max(sub, _round_up(block_rows, sub))

    bp_pad = _round_up(bp, block_rows)                # pad instead of odd fallbacks
    grid = bp_pad // block_rows
    b_total = bp_pad * p

    if b_total != B:                                  # zero-pad batch, slice output later
        pad = b_total - B
        x = jnp.pad(x, ((0, pad), (0, 0)))
        conditional = jnp.pad(conditional, ((0, pad), (0, 0)))

    # Lane-dense packed views (free, contiguous reshapes).
    x_p = x.reshape(bp_pad, p * dout)
    cond_p = conditional.reshape(bp_pad, p * din)

    vmem_limit = int(min(vmem_cap * 0.9,
                         max(32 << 20,
                             resident_bytes + block_rows * stream_row_bytes
                             + (4 << 20))))

    cost = pl.CostEstimate(
        flops=2 * B * din * 2 * dout,                 # true FLOPs (no kron zero-blocks)
        transcendentals=0,
        bytes_accessed=(x_p.size * x_p.dtype.itemsize * 2
                        + cond_p.size * cond_p.dtype.itemsize
                        + w_cat.size * w_cat.dtype.itemsize
                        + b_cat.size * b_cat.dtype.itemsize),
    )

    out_p = pl.pallas_call(
        film_kernel,
        out_shape=jax.ShapeDtypeStruct((bp_pad, p * dout), x.dtype),
        grid_spec=pltpu.PrefetchScalarGridSpec(
            num_scalar_prefetch=0,
            grid=(grid,),
            in_specs=[
                pl.BlockSpec((block_rows, p * dout), lambda i: (i, 0)),   # x (packed)
                pl.BlockSpec((block_rows, p * din), lambda i: (i, 0)),    # cond (packed)
                _resident_spec((p * din, 2 * p * dout)),                  # fused W (resident)
                _resident_spec((1, 2 * p * dout)),                        # fused bias (+1 folded)
            ],
            out_specs=pl.BlockSpec((block_rows, p * dout), lambda i: (i, 0)),
        ),
        compiler_params=pltpu.CompilerParams(
            dimension_semantics=("parallel",),        # shard batch tiles across TCs
            vmem_limit_bytes=vmem_limit,
        ),
        cost_estimate=cost,
    )(x_p, cond_p, w_cat, b_cat)

    return out_p.reshape(b_total, dout)[:B]


# --------------------------------------------------------------------------
# Public entry points
# --------------------------------------------------------------------------
class FiLMPallas:
    """FiLM with the fused/packed parameters cached across forward calls."""

    def __init__(self, wg, bg, wb, bb, *, x_dtype=jnp.float32,
                 cond_dtype=None, batch_hint=None):
        dout, din = wg.shape
        cond_dtype = np.dtype(cond_dtype if cond_dtype is not None else jnp.float32)
        # bf16 activations -> keep fused weights bf16 (MXU-native), f32 accumulate.
        w_dtype = jnp.bfloat16 if cond_dtype == np.dtype(jnp.bfloat16) else jnp.float32
        sub = _sublane_rows(x_dtype)
        self.pack = _pack_factor(din, dout, np.dtype(w_dtype).itemsize,
                                 batch_hint=batch_hint, sub=sub)
        self.w_cat, self.b_cat = prepare_film_params(
            wg, bg, wb, bb, pack=self.pack, weight_dtype=w_dtype)

    def __call__(self, x, conditional, *, block_rows=None):
        return _film_apply(x, conditional, self.w_cat, self.b_cat, self.pack,
                           block_rows=block_rows)


def film(x, conditional, wg, bg, wb, bb, *, block_rows=None):
    """One-shot functional FiLM forward (prep not cached across calls)."""
    mod = FiLMPallas(wg, bg, wb, bb, x_dtype=x.dtype,
                     cond_dtype=conditional.dtype, batch_hint=x.shape[0])
    return mod(x, conditional, block_rows=block_rows)


# --------------------------------------------------------------------------
# Pure-JAX reference
# --------------------------------------------------------------------------
def film_reference(x, conditional, wg, bg, wb, bb):
    gamma = conditional @ wg.T + bg
    beta = conditional @ wb.T + bb
    return x * (1.0 + gamma) + beta


# --------------------------------------------------------------------------
# Demo / self-test
# --------------------------------------------------------------------------
if __name__ == "__main__":
    key = jax.random.PRNGKey(0)
    kx, kc, kwg, kbg, kwb, kbb = jax.random.split(key, 6)

    batch = 64
    input_dimension = 32    # conditional feature size (Din)
    output_dimension = 64   # x feature size (Dout)

    x = jax.random.normal(kx, (batch, output_dimension), dtype=jnp.float32)
    conditional = jax.random.normal(kc, (batch, input_dimension), dtype=jnp.float32)

    # nn.Linear-style parameters: weight (Dout, Din), bias (Dout,)
    scale = 1.0 / jnp.sqrt(input_dimension)
    wg = jax.random.uniform(kwg, (output_dimension, input_dimension),
                            minval=-scale, maxval=scale, dtype=jnp.float32)
    bg = jax.random.uniform(kbg, (output_dimension,),
                            minval=-scale, maxval=scale, dtype=jnp.float32)
    wb = jax.random.uniform(kwb, (output_dimension, input_dimension),
                            minval=-scale, maxval=scale, dtype=jnp.float32)
    bb = jax.random.uniform(kbb, (output_dimension,),
                            minval=-scale, maxval=scale, dtype=jnp.float32)

    # Cached-parameter path (weight prep hoisted out of the per-call hot loop).
    mod = FiLMPallas(wg, bg, wb, bb, x_dtype=x.dtype,
                     cond_dtype=conditional.dtype, batch_hint=batch)
    out = mod(x, conditional)
    out = jax.block_until_ready(out)

    ref = film_reference(x, conditional, wg, bg, wb, bb)
    assert out.shape == (batch, output_dimension)
    assert jnp.allclose(out, ref, atol=1e-5, rtol=1e-5), "mismatch vs reference"

    # Functional path (auto tiling) must also agree.
    out2 = jax.block_until_ready(film(x, conditional, wg, bg, wb, bb))
    assert jnp.allclose(out2, ref, atol=1e-5, rtol=1e-5), "mismatch vs reference"

    print("KERNEL_OK")
</pallas_src>

<mosaic_0001>
module attributes {stable_mosaic.version = 11 : i64} {
  func.func @film_kernel(%arg0: i32, %arg1: memref<8x512xf32, #tpu.memory_space<vmem>>, %arg2: memref<8x256xf32, #tpu.memory_space<vmem>>, %arg3: memref<256x1024xf32, #tpu.memory_space<vmem>>, %arg4: memref<1x1024xf32, #tpu.memory_space<vmem>>, %arg5: memref<8x512xf32, #tpu.memory_space<vmem>>) attributes {dimension_semantics = [#tpu.dimension_semantics<parallel>], iteration_bounds = array<i64: 1>, scalar_prefetch = 0 : i64, scratch_operands = 0 : i64, tpu.core_type = #tpu.core_type<tc>, window_params = [{transform_indices = @transform_0, window_bounds = array<i64: 8, 512>}, {transform_indices = @transform_1, window_bounds = array<i64: 8, 256>}, {pipeline_mode = #tpu.pipeline_mode<synchronous>, transform_indices = @transform_2, window_bounds = array<i64: 256, 1024>}, {pipeline_mode = #tpu.pipeline_mode<synchronous>, transform_indices = @transform_3, window_bounds = array<i64: 1, 1024>}, {transform_indices = @transform_4, window_bounds = array<i64: 8, 512>}]} {
    %c0 = arith.constant 0 : index
    %c0_0 = arith.constant 0 : index
    %0 = vector.load %arg2[%c0, %c0_0] : memref<8x256xf32, #tpu.memory_space<vmem>>, vector<8x256xf32>
    %c0_1 = arith.constant 0 : index
    %c0_2 = arith.constant 0 : index
    %1 = vector.load %arg3[%c0_1, %c0_2] : memref<256x1024xf32, #tpu.memory_space<vmem>>, vector<256x1024xf32>
    %cst = arith.constant dense<0.000000e+00> : vector<8x1024xf32>
    %2 = tpu.matmul %0, %1, %cst {dimension_numbers = #tpu.dot_dimension_numbers<[1], [0], [0], [1], [0, 0, 1, 1], [], []>} : vector<8x256xf32>, vector<256x1024xf32>, vector<8x1024xf32> -> vector<8x1024xf32>
    %c0_3 = arith.constant 0 : index
    %c0_4 = arith.constant 0 : index
    %3 = vector.load %arg4[%c0_3, %c0_4] : memref<1x1024xf32, #tpu.memory_space<vmem>>, vector<1x1024xf32>
    %4 = vector.broadcast %3 : vector<1x1024xf32> to vector<8x1024xf32>
    %5 = arith.addf %2, %4 : vector<8x1024xf32>
    %6 = vector.extract_strided_slice %5 {offsets = [0, 0], sizes = [8, 512], strides = [1, 1]} : vector<8x1024xf32> to vector<8x512xf32>
    %7 = vector.extract_strided_slice %5 {offsets = [0, 512], sizes = [8, 512], strides = [1, 1]} : vector<8x1024xf32> to vector<8x512xf32>
    %c0_5 = arith.constant 0 : index
    %c0_6 = arith.constant 0 : index
    %8 = vector.load %arg1[%c0_5, %c0_6] : memref<8x512xf32, #tpu.memory_space<vmem>>, vector<8x512xf32>
    %9 = arith.mulf %8, %6 : vector<8x512xf32>
    %10 = arith.addf %9, %7 : vector<8x512xf32>
    %c0_7 = arith.constant 0 : index
    %c0_8 = arith.constant 0 : index
    %11 = vector.load %arg5[%c0_7, %c0_8] : memref<8x512xf32, #tpu.memory_space<vmem>>, vector<8x512xf32>
    tpu.vector_store %arg5[%c0_7, %c0_8], %10 {strides = array<i32>} : memref<8x512xf32, #tpu.memory_space<vmem>>, vector<8x512xf32>,
    return
  }
  func.func @transform_0(%arg0: i32) -> (i32, i32) {
    %c0_i32 = arith.constant 0 : i32
    %c0_i32_0 = arith.constant 0 : i32
    return %arg0, %c0_i32 : i32, i32
  }
  func.func @transform_1(%arg0: i32) -> (i32, i32) {
    %c0_i32 = arith.constant 0 : i32
    %c0_i32_0 = arith.constant 0 : i32
    return %arg0, %c0_i32 : i32, i32
  }
  func.func @transform_2(%arg0: i32) -> (i32, i32) {
    %c0_i32 = arith.constant 0 : i32
    %c0_i32_0 = arith.constant 0 : i32
    %c0_i32_1 = arith.constant 0 : i32
    return %c0_i32, %c0_i32_0 : i32, i32
  }
  func.func @transform_3(%arg0: i32) -> (i32, i32) {
    %c0_i32 = arith.constant 0 : i32
    %c0_i32_0 = arith.constant 0 : i32
    %c0_i32_1 = arith.constant 0 : i32
    return %c0_i32, %c0_i32_0 : i32, i32
  }
  func.func @transform_4(%arg0: i32) -> (i32, i32) {
    %c0_i32 = arith.constant 0 : i32
    %c0_i32_0 = arith.constant 0 : i32
    return %arg0, %c0_i32 : i32, i32
  }
}

</mosaic_0001>

<llo_original>
// kernel: tpu_custom_call.1
$region0: #{tpu_custom_call.1}
  #allocation0 [shape = 'u32[]', space=smem, size = 0x4, offset = 0x4, fixed_abs, tag = 'smem constant byte address 0x4 - core index']
  #allocation1 [shape = 'u32[144,128]{1,0:T(1,128)}', space=vmem, size = 0x12000, scoped, tag = 'internal scratch']
  %s0 = inlined_call_operand.hbm [shape: f32[8,512], index: 0, kind: input, shape index: {}]
  %s1 = inlined_call_operand.hbm [shape: f32[8,256], index: 1, kind: input, shape index: {}]
  %s2 = inlined_call_operand.hbm [shape: f32[256,1024], index: 2, kind: input, shape index: {}]
  %s3 = inlined_call_operand.vmem [shape: f32[1,1024], index: 3, kind: input, shape index: {}]
  %s4 = inlined_call_operand.hbm [shape: f32[8,512], index: 4, kind: output, shape index: {}]
  %s5 = sld [smem:[#allocation0]]
  $region38: #{tpu_custom_call.1} parent=0
    _
  %s7 = ssub.s32 1, %s5
  %s8 = scalar_select 0, %s7, %s5
  $region1: #{tpu_custom_call.1} parent=0
    #allocation2 [shape = 'u8[16384]{0}', space=vmem, size = 0x4000, scoped, tag = 'input window, operand 0, single buffered']
    #allocation3 [shape = 's32[1]{0}', space=sflag, size = 0x4, scoped, tag = 'scoped memory for tpu_custom_call.1']
    #allocation4 [shape = 's32[1]{0}', space=sflag, size = 0x4, scoped, tag = 'scoped memory for tpu_custom_call.1']
    #allocation5 [shape = 'u8[8192]{0}', space=vmem, size = 0x2000, scoped, tag = 'input window, operand 1, single buffered']
    #allocation6 [shape = 's32[1]{0}', space=sflag, size = 0x4, scoped, tag = 'scoped memory for tpu_custom_call.1']
    #allocation7 [shape = 'u8[1048576]{0}', space=vmem, size = 0x100000, scoped, tag = 'input window, operand 2, single buffered']
    #allocation8 [shape = 'u8[16384]{0}', space=vmem, size = 0x4000, scoped, tag = 'output window, operand 0, single buffered']
    %9 = vsyncpa [#allocation3], 0
    %10 = vsyncpa [#allocation6], 0
    %11 = vsyncpa [#allocation4], 0
    // Predicated region
    $region2: #{tpu_custom_call.1} parent=1 // pred_check
      _
    $region3: #{tpu_custom_call.1} parent=1 // pred_check_branch
      %13 = sbr.rel (0) target = $region5
    $region4: #{tpu_custom_call.1} parent=1 // pred_region
      %s15 = ssub.s32 512, 512
      %16 = vsyncadd [#allocation3], %s15
      %s18 = sshll.u32 [#allocation2], 4
      %s19 = int_to_ptr.vmem [resolvable:$true] %s18
      %21 = dma.hbm_to_vmem [thread:$0]  %s0, 512, %s19, [#allocation3]
    $region5: #{tpu_custom_call.1} parent=1 // pred_fallthru
      _
    // Predicated region
    $region6: #{tpu_custom_call.1} parent=1 // pred_check
      _
    $region7: #{tpu_custom_call.1} parent=1 // pred_check_branch
      %23 = sbr.rel (0) target = $region9
    $region8: #{tpu_custom_call.1} parent=1 // pred_region
      %s25 = ssub.s32 256, 256
      %26 = vsyncadd [#allocation6], %s25
      %s28 = sshll.u32 [#allocation5], 4
      %s29 = int_to_ptr.vmem [resolvable:$true] %s28
      %31 = dma.hbm_to_vmem [thread:$0]  %s1, 256, %s29, [#allocation6]
    $region9: #{tpu_custom_call.1} parent=1 // pred_fallthru
      _
    // Predicated region
    $region10: #{tpu_custom_call.1} parent=1 // pred_check
      _
    $region11: #{tpu_custom_call.1} parent=1 // pred_check_branch
      %33 = sbr.rel (0) target = $region13
    $region12: #{tpu_custom_call.1} parent=1 // pred_region
      %s35 = ssub.s32 32768, 32768
      %36 = vsyncadd [#allocation6], %s35
      %s37 = sshll.u32 [#allocation7], 4
      %s38 = int_to_ptr.vmem [resolvable:$true] %s37
      %43 = dma.hbm_to_vmem [thread:$0]  %s2, 32768, %s38, [#allocation6], 1024, 1024, 64
    $region13: #{tpu_custom_call.1} parent=1 // pred_fallthru
      _
    // Predicated region
    $region14: #{tpu_custom_call.1} parent=1 // pred_check
      _
    $region15: #{tpu_custom_call.1} parent=1 // pred_check_branch
      %45 = sbr.rel (0) target = $region17
    $region16: #{tpu_custom_call.1} parent=1 // pred_region
      _
    $region17: #{tpu_custom_call.1} parent=1 // pred_fallthru
      _
    // Predicated region
    $region18: #{tpu_custom_call.1} parent=1 // pred_check
      _
    $region19: #{tpu_custom_call.1} parent=1 // pred_check_branch
      %47 = sbr.rel (0) target = $region21
    $region20: #{tpu_custom_call.1} parent=1 // pred_region
      %48 = dma.done [#allocation3], 512
    $region21: #{tpu_custom_call.1} parent=1 // pred_fallthru
      _
    // Predicated region
    $region22: #{tpu_custom_call.1} parent=1 // pred_check
      _
    $region23: #{tpu_custom_call.1} parent=1 // pred_check_branch
      %50 = sbr.rel (0) target = $region25
    $region24: #{tpu_custom_call.1} parent=1 // pred_region
      %51 = dma.done [#allocation6], 256
    $region25: #{tpu_custom_call.1} parent=1 // pred_fallthru
      _
    // Predicated region
    $region26: #{tpu_custom_call.1} parent=1 // pred_check
      _
    $region27: #{tpu_custom_call.1} parent=1 // pred_check_branch
      %53 = sbr.rel (0) target = $region29
    $region28: #{tpu_custom_call.1} parent=1 // pred_region
      %54 = dma.done [#allocation6], 32768
    $region29: #{tpu_custom_call.1} parent=1 // pred_fallthru
      _
    %v55 = vld [vmem:[#allocation5] sm:$0xff]
    %v56 = vld [vmem:[#allocation5 + $0x8] sm:$0xff]
    %v57 = vld [vmem:[#allocation7] sm:$0xff]
    %v58 = vld [vmem:[#allocation7 + $0x8] sm:$0xff]
    %v59 = vld [vmem:[#allocation7 + $0x10] sm:$0xff]
    %v60 = vld [vmem:[#allocation7 + $0x18] sm:$0xff]
    %v61 = vld [vmem:[#allocation7 + $0x20] sm:$0xff]
    %v62 = vld [vmem:[#allocation7 + $0x28] sm:$0xff]
    %v63 = vld [vmem:[#allocation7 + $0x30] sm:$0xff]
    %v64 = vld [vmem:[#allocation7 + $0x38] sm:$0xff]
    %v65 = vld [vmem:[#allocation7 + $0x40] sm:$0xff]
    %v66 = vld [vmem:[#allocation7 + $0x48] sm:$0xff]
    %v67 = vld [vmem:[#allocation7 + $0x50] sm:$0xff]
    %v68 = vld [vmem:[#allocation7 + $0x58] sm:$0xff]
    %v69 = vld [vmem:[#allocation7 + $0x60] sm:$0xff]
    %v70 = vld [vmem:[#allocation7 + $0x68] sm:$0xff]
    %v71 = vld [vmem:[#allocation7 + $0x70] sm:$0xff]
    %v72 = vld [vmem:[#allocation7 + $0x78] sm:$0xff]
    %v73 = vld [vmem:[#allocation7 + $0x80] sm:$0xff]
    %v74 = vld [vmem:[#allocation7 + $0x88] sm:$0xff]
    %v75 = vld [vmem:[#allocation7 + $0x90] sm:$0xff]
    %v76 = vld [vmem:[#allocation7 + $0x98] sm:$0xff]
    %v77 = vld [vmem:[#allocation7 + $0xa0] sm:$0xff]
    %v78 = vld [vmem:[#allocation7 + $0xa8] sm:$0xff]
    %v79 = vld [vmem:[#allocation7 + $0xb0] sm:$0xff]
    %v80 = vld [vmem:[#allocation7 + $0xb8] sm:$0xff]
    %v81 = vld [vmem:[#allocation7 + $0xc0] sm:$0xff]
    %v82 = vld [vmem:[#allocation7 + $0xc8] sm:$0xff]
    %v83 = vld [vmem:[#allocation7 + $0xd0] sm:$0xff]
    %v84 = vld [vmem:[#allocation7 + $0xd8] sm:$0xff]
    %v85 = vld [vmem:[#allocation7 + $0xe0] sm:$0xff]
    %v86 = vld [vmem:[#allocation7 + $0xe8] sm:$0xff]
    %v87 = vld [vmem:[#allocation7 + $0xf0] sm:$0xff]
    %v88 = vld [vmem:[#allocation7 + $0xf8] sm:$0xff]
    %v89 = vld [vmem:[#allocation7 + $0x100] sm:$0xff]
    %v90 = vld [vmem:[#allocation7 + $0x108] sm:$0xff]
    %v91 = vld [vmem:[#allocation7 + $0x110] sm:$0xff]
    %v92 = vld [vmem:[#allocation7 + $0x118] sm:$0xff]
    %v93 = vld [vmem:[#allocation7 + $0x120] sm:$0xff]
    %v94 = vld [vmem:[#allocation7 + $0x128] sm:$0xff]
    %v95 = vld [vmem:[#allocation7 + $0x130] sm:$0xff]
    %v96 = vld [vmem:[#allocation7 + $0x138] sm:$0xff]
    %v97 = vld [vmem:[#allocation7 + $0x140] sm:$0xff]
    %v98 = vld [vmem:[#allocation7 + $0x148] sm:$0xff]
    %v99 = vld [vmem:[#allocation7 + $0x150] sm:$0xff]
    %v100 = vld [vmem:[#allocation7 + $0x158] sm:$0xff]
    %v101 = vld [vmem:[#allocation7 + $0x160] sm:$0xff]
    %v102 = vld [vmem:[#allocation7 + $0x168] sm:$0xff]
    %v103 = vld [vmem:[#allocation7 + $0x170] sm:$0xff]
    %v104 = vld [vmem:[#allocation7 + $0x178] sm:$0xff]
    %v105 = vld [vmem:[#allocation7 + $0x180] sm:$0xff]
    %v106 = vld [vmem:[#allocation7 + $0x188] sm:$0xff]
    %v107 = vld [vmem:[#allocation7 + $0x190] sm:$0xff]
    %v108 = vld [vmem:[#allocation7 + $0x198] sm:$0xff]
    %v109 = vld [vmem:[#allocation7 + $0x1a0] sm:$0xff]
    %v110 = vld [vmem:[#allocation7 + $0x1a8] sm:$0xff]
    %v111 = vld [vmem:[#allocation7 + $0x1b0] sm:$0xff]
    %v112 = vld [vmem:[#allocation7 + $0x1b8] sm:$0xff]
    %v113 = vld [vmem:[#allocation7 + $0x1c0] sm:$0xff]
    %v114 = vld [vmem:[#allocation7 + $0x1c8] sm:$0xff]
    %v115 = vld [vmem:[#allocation7 + $0x1d0] sm:$0xff]
    %v116 = vld [vmem:[#allocation7 + $0x1d8] sm:$0xff]
    %v117 = vld [vmem:[#allocation7 + $0x1e0] sm:$0xff]
    %v118 = vld [vmem:[#allocation7 + $0x1e8] sm:$0xff]
    %v119 = vld [vmem:[#allocation7 + $0x1f0] sm:$0xff]
    %v120 = vld [vmem:[#allocation7 + $0x1f8] sm:$0xff]
    %v121 = vld [vmem:[#allocation7 + $0x200] sm:$0xff]
    %v122 = vld [vmem:[#allocation7 + $0x208] sm:$0xff]
    %v123 = vld [vmem:[#allocation7 + $0x210] sm:$0xff]
    %v124 = vld [vmem:[#allocation7 + $0x218] sm:$0xff]
    %v125 = vld [vmem:[#allocation7 + $0x220] sm:$0xff]
    %v126 = vld [vmem:[#allocation7 + $0x228] sm:$0xff]
    %v127 = vld [vmem:[#allocation7 + $0x230] sm:$0xff]
    %v128 = vld [vmem:[#allocation7 + $0x238] sm:$0xff]
    %v129 = vld [vmem:[#allocation7 + $0x240] sm:$0xff]
    %v130 = vld [vmem:[#allocation7 + $0x248] sm:$0xff]
    %v131 = vld [vmem:[#allocation7 + $0x250] sm:$0xff]
    %v132 = vld [vmem:[#allocation7 + $0x258] sm:$0xff]
    %v133 = vld [vmem:[#allocation7 + $0x260] sm:$0xff]
    %v134 = vld [vmem:[#allocation7 + $0x268] sm:$0xff]
    %v135 = vld [vmem:[#allocation7 + $0x270] sm:$0xff]
    %v136 = vld [vmem:[#allocation7 + $0x278] sm:$0xff]
    %v137 = vld [vmem:[#allocation7 + $0x280] sm:$0xff]
    %v138 = vld [vmem:[#allocation7 + $0x288] sm:$0xff]
    %v139 = vld [vmem:[#allocation7 + $0x290] sm:$0xff]
    %v140 = vld [vmem:[#allocation7 + $0x298] sm:$0xff]
    %v141 = vld [vmem:[#allocation7 + $0x2a0] sm:$0xff]
    %v142 = vld [vmem:[#allocation7 + $0x2a8] sm:$0xff]
    %v143 = vld [vmem:[#allocation7 + $0x2b0] sm:$0xff]
    %v144 = vld [vmem:[#allocation7 + $0x2b8] sm:$0xff]
    %v145 = vld [vmem:[#allocation7 + $0x2c0] sm:$0xff]
    %v146 = vld [vmem:[#allocation7 + $0x2c8] sm:$0xff]
    %v147 = vld [vmem:[#allocation7 + $0x2d0] sm:$0xff]
    %v148 = vld [vmem:[#allocation7 + $0x2d8] sm:$0xff]
    %v149 = vld [vmem:[#allocation7 + $0x2e0] sm:$0xff]
    %v150 = vld [vmem:[#allocation7 + $0x2e8] sm:$0xff]
    %v151 = vld [vmem:[#allocation7 + $0x2f0] sm:$0xff]
    %v152 = vld [vmem:[#allocation7 + $0x2f8] sm:$0xff]
    %v153 = vld [vmem:[#allocation7 + $0x300] sm:$0xff]
    %v154 = vld [vmem:[#allocation7 + $0x308] sm:$0xff]
    %v155 = vld [vmem:[#allocation7 + $0x310] sm:$0xff]
    %v156 = vld [vmem:[#allocation7 + $0x318] sm:$0xff]
    %v157 = vld [vmem:[#allocation7 + $0x320] sm:$0xff]
    %v158 = vld [vmem:[#allocation7 + $0x328] sm:$0xff]
    %v159 = vld [vmem:[#allocation7 + $0x330] sm:$0xff]
    %v160 = vld [vmem:[#allocation7 + $0x338] sm:$0xff]
    %v161 = vld [vmem:[#allocation7 + $0x340] sm:$0xff]
    %v162 = vld [vmem:[#allocation7 + $0x348] sm:$0xff]
    %v163 = vld [vmem:[#allocation7 + $0x350] sm:$0xff]
    %v164 = vld [vmem:[#allocation7 + $0x358] sm:$0xff]
    %v165 = vld [vmem:[#allocation7 + $0x360] sm:$0xff]
    %v166 = vld [vmem:[#allocation7 + $0x368] sm:$0xff]
    %v167 = vld [vmem:[#allocation7 + $0x370] sm:$0xff]
    %v168 = vld [vmem:[#allocation7 + $0x378] sm:$0xff]
    %v169 = vld [vmem:[#allocation7 + $0x380] sm:$0xff]
    %v170 = vld [vmem:[#allocation7 + $0x388] sm:$0xff]
    %v171 = vld [vmem:[#allocation7 + $0x390] sm:$0xff]
    %v172 = vld [vmem:[#allocation7 + $0x398] sm:$0xff]
    %v173 = vld [vmem:[#allocation7 + $0x3a0] sm:$0xff]
    %v174 = vld [vmem:[#allocation7 + $0x3a8] sm:$0xff]
    %v175 = vld [vmem:[#allocation7 + $0x3b0] sm:$0xff]
    %v176 = vld [vmem:[#allocation7 + $0x3b8] sm:$0xff]
    %v177 = vld [vmem:[#allocation7 + $0x3c0] sm:$0xff]
    %v178 = vld [vmem:[#allocation7 + $0x3c8] sm:$0xff]
    %v179 = vld [vmem:[#allocation7 + $0x3d0] sm:$0xff]
    %v180 = vld [vmem:[#allocation7 + $0x3d8] sm:$0xff]
    %v181 = vld [vmem:[#allocation7 + $0x3e0] sm:$0xff]
    %v182 = vld [vmem:[#allocation7 + $0x3e8] sm:$0xff]
    %v183 = vld [vmem:[#allocation7 + $0x3f0] sm:$0xff]
    %v184 = vld [vmem:[#allocation7 + $0x3f8] sm:$0xff]
    %v185 = vld [vmem:[#allocation7 + $0x400] sm:$0xff]
    %v186 = vld [vmem:[#allocation7 + $0x408] sm:$0xff]
    %v187 = vld [vmem:[#allocation7 + $0x410] sm:$0xff]
    %v188 = vld [vmem:[#allocation7 + $0x418] sm:$0xff]
    %v189 = vld [vmem:[#allocation7 + $0x420] sm:$0xff]
    %v190 = vld [vmem:[#allocation7 + $0x428] sm:$0xff]
    %v191 = vld [vmem:[#allocation7 + $0x430] sm:$0xff]
    %v192 = vld [vmem:[#allocation7 + $0x438] sm:$0xff]
    %v193 = vld [vmem:[#allocation7 + $0x440] sm:$0xff]
    %v194 = vld [vmem:[#allocation7 + $0x448] sm:$0xff]
    %v195 = vld [vmem:[#allocation7 + $0x450] sm:$0xff]
    %v196 = vld [vmem:[#allocation7 + $0x458] sm:$0xff]
    %v197 = vld [vmem:[#allocation7 + $0x460] sm:$0xff]
    %v198 = vld [vmem:[#allocation7 + $0x468] sm:$0xff]
    %v199 = vld [vmem:[#allocation7 + $0x470] sm:$0xff]
    %v200 = vld [vmem:[#allocation7 + $0x478] sm:$0xff]
    %v201 = vld [vmem:[#allocation7 + $0x480] sm:$0xff]
    %v202 = vld [vmem:[#allocation7 + $0x488] sm:$0xff]
    %v203 = vld [vmem:[#allocation7 + $0x490] sm:$0xff]
    %v204 = vld [vmem:[#allocation7 + $0x498] sm:$0xff]
    %v205 = vld [vmem:[#allocation7 + $0x4a0] sm:$0xff]
    %v206 = vld [vmem:[#allocation7 + $0x4a8] sm:$0xff]
    %v207 = vld [vmem:[#allocation7 + $0x4b0] sm:$0xff]
    %v208 = vld [vmem:[#allocation7 + $0x4b8] sm:$0xff]
    %v209 = vld [vmem:[#allocation7 + $0x4c0] sm:$0xff]
    %v210 = vld [vmem:[#allocation7 + $0x4c8] sm:$0xff]
    %v211 = vld [vmem:[#allocation7 + $0x4d0] sm:$0xff]
    %v212 = vld [vmem:[#allocation7 + $0x4d8] sm:$0xff]
    %v213 = vld [vmem:[#allocation7 + $0x4e0] sm:$0xff]
    %v214 = vld [vmem:[#allocation7 + $0x4e8] sm:$0xff]
    %v215 = vld [vmem:[#allocation7 + $0x4f0] sm:$0xff]
    %v216 = vld [vmem:[#allocation7 + $0x4f8] sm:$0xff]
    %v217 = vld [vmem:[#allocation7 + $0x500] sm:$0xff]
    %v218 = vld [vmem:[#allocation7 + $0x508] sm:$0xff]
    %v219 = vld [vmem:[#allocation7 + $0x510] sm:$0xff]
    %v220 = vld [vmem:[#allocation7 + $0x518] sm:$0xff]
    %v221 = vld [vmem:[#allocation7 + $0x520] sm:$0xff]
    %v222 = vld [vmem:[#allocation7 + $0x528] sm:$0xff]
    %v223 = vld [vmem:[#allocation7 + $0x530] sm:$0xff]
    %v224 = vld [vmem:[#allocation7 + $0x538] sm:$0xff]
    %v225 = vld [vmem:[#allocation7 + $0x540] sm:$0xff]
    %v226 = vld [vmem:[#allocation7 + $0x548] sm:$0xff]
    %v227 = vld [vmem:[#allocation7 + $0x550] sm:$0xff]
    %v228 = vld [vmem:[#allocation7 + $0x558] sm:$0xff]
    %v229 = vld [vmem:[#allocation7 + $0x560] sm:$0xff]
    %v230 = vld [vmem:[#allocation7 + $0x568] sm:$0xff]
    %v231 = vld [vmem:[#allocation7 + $0x570] sm:$0xff]
    %v232 = vld [vmem:[#allocation7 + $0x578] sm:$0xff]
    %v233 = vld [vmem:[#allocation7 + $0x580] sm:$0xff]
    %v234 = vld [vmem:[#allocation7 + $0x588] sm:$0xff]
    %v235 = vld [vmem:[#allocation7 + $0x590] sm:$0xff]
    %v236 = vld [vmem:[#allocation7 + $0x598] sm:$0xff]
    %v237 = vld [vmem:[#allocation7 + $0x5a0] sm:$0xff]
    %v238 = vld [vmem:[#allocation7 + $0x5a8] sm:$0xff]
    %v239 = vld [vmem:[#allocation7 + $0x5b0] sm:$0xff]
    %v240 = vld [vmem:[#allocation7 + $0x5b8] sm:$0xff]
    %v241 = vld [vmem:[#allocation7 + $0x5c0] sm:$0xff]
    %v242 = vld [vmem:[#allocation7 + $0x5c8] sm:$0xff]
    %v243 = vld [vmem:[#allocation7 + $0x5d0] sm:$0xff]
    %v244 = vld [vmem:[#allocation7 + $0x5d8] sm:$0xff]
    %v245 = vld [vmem:[#allocation7 + $0x5e0] sm:$0xff]
    %v246 = vld [vmem:[#allocation7 + $0x5e8] sm:$0xff]
    %v247 = vld [vmem:[#allocation7 + $0x5f0] sm:$0xff]
    %v248 = vld [vmem:[#allocation7 + $0x5f8] sm:$0xff]
    %v249 = vld [vmem:[#allocation7 + $0x600] sm:$0xff]
    %v250 = vld [vmem:[#allocation7 + $0x608] sm:$0xff]
    %v251 = vld [vmem:[#allocation7 + $0x610] sm:$0xff]
    %v252 = vld [vmem:[#allocation7 + $0x618] sm:$0xff]
    %v253 = vld [vmem:[#allocation7 + $0x620] sm:$0xff]
    %v254 = vld [vmem:[#allocation7 + $0x628] sm:$0xff]
    %v255 = vld [vmem:[#allocation7 + $0x630] sm:$0xff]
    %v256 = vld [vmem:[#allocation7 + $0x638] sm:$0xff]
    %v257 = vld [vmem:[#allocation7 + $0x640] sm:$0xff]
    %v258 = vld [vmem:[#allocation7 + $0x648] sm:$0xff]
    %v259 = vld [vmem:[#allocation7 + $0x650] sm:$0xff]
    %v260 = vld [vmem:[#allocation7 + $0x658] sm:$0xff]
    %v261 = vld [vmem:[#allocation7 + $0x660] sm:$0xff]
    %v262 = vld [vmem:[#allocation7 + $0x668] sm:$0xff]
    %v263 = vld [vmem:[#allocation7 + $0x670] sm:$0xff]
    %v264 = vld [vmem:[#allocation7 + $0x678] sm:$0xff]
    %v265 = vld [vmem:[#allocation7 + $0x680] sm:$0xff]
    %v266 = vld [vmem:[#allocation7 + $0x688] sm:$0xff]
    %v267 = vld [vmem:[#allocation7 + $0x690] sm:$0xff]
    %v268 = vld [vmem:[#allocation7 + $0x698] sm:$0xff]
    %v269 = vld [vmem:[#allocation7 + $0x6a0] sm:$0xff]
    %v270 = vld [vmem:[#allocation7 + $0x6a8] sm:$0xff]
    %v271 = vld [vmem:[#allocation7 + $0x6b0] sm:$0xff]
    %v272 = vld [vmem:[#allocation7 + $0x6b8] sm:$0xff]
    %v273 = vld [vmem:[#allocation7 + $0x6c0] sm:$0xff]
    %v274 = vld [vmem:[#allocation7 + $0x6c8] sm:$0xff]
    %v275 = vld [vmem:[#allocation7 + $0x6d0] sm:$0xff]
    %v276 = vld [vmem:[#allocation7 + $0x6d8] sm:$0xff]
    %v277 = vld [vmem:[#allocation7 + $0x6e0] sm:$0xff]
    %v278 = vld [vmem:[#allocation7 + $0x6e8] sm:$0xff]
    %v279 = vld [vmem:[#allocation7 + $0x6f0] sm:$0xff]
    %v280 = vld [vmem:[#allocation7 + $0x6f8] sm:$0xff]
    %v281 = vld [vmem:[#allocation7 + $0x700] sm:$0xff]
    %v282 = vld [vmem:[#allocation7 + $0x708] sm:$0xff]
    %v283 = vld [vmem:[#allocation7 + $0x710] sm:$0xff]
    %v284 = vld [vmem:[#allocation7 + $0x718] sm:$0xff]
    %v285 = vld [vmem:[#allocation7 + $0x720] sm:$0xff]
    %v286 = vld [vmem:[#allocation7 + $0x728] sm:$0xff]
    %v287 = vld [vmem:[#allocation7 + $0x730] sm:$0xff]
    %v288 = vld [vmem:[#allocation7 + $0x738] sm:$0xff]
    %v289 = vld [vmem:[#allocation7 + $0x740] sm:$0xff]
    %v290 = vld [vmem:[#allocation7 + $0x748] sm:$0xff]
    %v291 = vld [vmem:[#allocation7 + $0x750] sm:$0xff]
    %v292 = vld [vmem:[#allocation7 + $0x758] sm:$0xff]
    %v293 = vld [vmem:[#allocation7 + $0x760] sm:$0xff]
    %v294 = vld [vmem:[#allocation7 + $0x768] sm:$0xff]
    %v295 = vld [vmem:[#allocation7 + $0x770] sm:$0xff]
    %v296 = vld [vmem:[#allocation7 + $0x778] sm:$0xff]
    %v297 = vld [vmem:[#allocation7 + $0x780] sm:$0xff]
    %v298 = vld [vmem:[#allocation7 + $0x788] sm:$0xff]
    %v299 = vld [vmem:[#allocation7 + $0x790] sm:$0xff]
    %v300 = vld [vmem:[#allocation7 + $0x798] sm:$0xff]
    %v301 = vld [vmem:[#allocation7 + $0x7a0] sm:$0xff]
    %v302 = vld [vmem:[#allocation7 + $0x7a8] sm:$0xff]
    %v303 = vld [vmem:[#allocation7 + $0x7b0] sm:$0xff]
    %v304 = vld [vmem:[#allocation7 + $0x7b8] sm:$0xff]
    %v305 = vld [vmem:[#allocation7 + $0x7c0] sm:$0xff]
    %v306 = vld [vmem:[#allocation7 + $0x7c8] sm:$0xff]
    %v307 = vld [vmem:[#allocation7 + $0x7d0] sm:$0xff]
    %v308 = vld [vmem:[#allocation7 + $0x7d8] sm:$0xff]
    %v309 = vld [vmem:[#allocation7 + $0x7e0] sm:$0xff]
    %v310 = vld [vmem:[#allocation7 + $0x7e8] sm:$0xff]
    %v311 = vld [vmem:[#allocation7 + $0x7f0] sm:$0xff]
    %v312 = vld [vmem:[#allocation7 + $0x7f8] sm:$0xff]
    %v313 = vld [vmem:[%s3] sm:$0xff]
    %v315 = vlaneseq
    %v316 = vshrl.u32 %v315, 7
    %v317 = vsub.s32 0, %v316
    %v318 = vrot.slane %v313, %v317
    %v319 = vlaneseq
    %v320 = vshrl.u32 %v319, 7
    %v321 = vsub.s32 1, %v320
    %v322 = vrot.slane %v313, %v321
    %v323 = vlaneseq
    %v324 = vshrl.u32 %v323, 7
    %v325 = vsub.s32 2, %v324
    %v326 = vrot.slane %v313, %v325
    %v327 = vlaneseq
    %v328 = vshrl.u32 %v327, 7
    %v329 = vsub.s32 3, %v328
    %v330 = vrot.slane %v313, %v329
    %v331 = vlaneseq
    %v332 = vshrl.u32 %v331, 7
    %v333 = vsub.s32 4, %v332
    %v334 = vrot.slane %v313, %v333
    %v335 = vlaneseq
    %v336 = vshrl.u32 %v335, 7
    %v337 = vsub.s32 5, %v336
    %v338 = vrot.slane %v313, %v337
    %v339 = vlaneseq
    %v340 = vshrl.u32 %v339, 7
    %v341 = vsub.s32 6, %v340
    %v342 = vrot.slane %v313, %v341
    %v343 = vlaneseq
    %v344 = vshrl.u32 %v343, 7
    %v345 = vsub.s32 7, %v344
    %v346 = vrot.slane %v313, %v345
    %355 = vmatprep.subr.mxu0 %v58
    %356 = vmatpush1.msra.mxu0 %v57
    %357 = vmatprep.subr.mxu0 %v66
    %358 = vmatpush1.msra.mxu0 %v65
    %359 = vmatprep.subr.mxu0 %v74
    %360 = vmatpush1.msra.mxu0 %v73
    %361 = vmatprep.subr.mxu0 %v82
    %362 = vmatpush1.msra.mxu0 %v81
    %363 = vmatprep.subr.mxu0 %v90
    %364 = vmatpush1.msra.mxu0 %v89
    %365 = vmatprep.subr.mxu0 %v98
    %366 = vmatpush1.msra.mxu0 %v97
    %367 = vmatprep.subr.mxu0 %v106
    %368 = vmatpush1.msra.mxu0 %v105
    %369 = vmatprep.subr.mxu0 %v114
    %370 = vmatpush1.msra.mxu0 %v113
    %371 = vmatprep.subr.mxu0 %v122
    %372 = vmatpush1.msra.mxu0 %v121
    %373 = vmatprep.subr.mxu0 %v130
    %374 = vmatpush1.msra.mxu0 %v129
    %375 = vmatprep.subr.mxu0 %v138
    %376 = vmatpush1.msra.mxu0 %v137
    %377 = vmatprep.subr.mxu0 %v146
    %378 = vmatpush1.msra.mxu0 %v145
    %379 = vmatprep.subr.mxu0 %v154
    %380 = vmatpush1.msra.mxu0 %v153
    %381 = vmatprep.subr.mxu0 %v162
    %382 = vmatpush1.msra.mxu0 %v161
    %383 = vmatprep.subr.mxu0 %v170
    %384 = vmatpush1.msra.mxu0 %v169
    %385 = vmatprep.subr.mxu0 %v178
    %386 = vmatpush1.msra.mxu0 %v177
    %387 = vmatprep.subr.mxu0 %v186
    %388 = vmatpush1.msra.mxu0 %v185
    %389 = vmatprep.subr.mxu0 %v194
    %390 = vmatpush1.msra.mxu0 %v193
    %391 = vmatprep.subr.mxu0 %v202
    %392 = vmatpush1.msra.mxu0 %v201
    %393 = vmatprep.subr.mxu0 %v210
    %394 = vmatpush1.msra.mxu0 %v209
    %395 = vmatprep.subr.mxu0 %v218
    %396 = vmatpush1.msra.mxu0 %v217
    %397 = vmatprep.subr.mxu0 %v226
    %398 = vmatpush1.msra.mxu0 %v225
    %399 = vmatprep.subr.mxu0 %v234
    %400 = vmatpush1.msra.mxu0 %v233
    %401 = vmatprep.subr.mxu0 %v242
    %402 = vmatpush1.msra.mxu0 %v241
    %403 = vmatprep.subr.mxu0 %v250
    %404 = vmatpush1.msra.mxu0 %v249
    %405 = vmatprep.subr.mxu0 %v258
    %406 = vmatpush1.msra.mxu0 %v257
    %407 = vmatprep.subr.mxu0 %v266
    %408 = vmatpush1.msra.mxu0 %v265
    %409 = vmatprep.subr.mxu0 %v274
    %410 = vmatpush1.msra.mxu0 %v273
    %411 = vmatprep.subr.mxu0 %v282
    %412 = vmatpush1.msra.mxu0 %v281
    %413 = vmatprep.subr.mxu0 %v290
    %414 = vmatpush1.msra.mxu0 %v289
    %415 = vmatprep.subr.mxu0 %v298
    %416 = vmatpush1.msra.mxu0 %v297
    %417 = vmatprep.subr.mxu0 %v306
    %418 = vmatpush1.msra.mxu0 %v305
    %419 = vmatprep.mubr.f32.mxu0 %v56
    %420 = vmatmul.mubr.f32.gmra.mrb[0].mxu0 %v55
    %v421 = vpop.f32.mrb[0].mxu0
    %v422 = vadd.f32 %v318, %v421
    %v423 = vpop.f32.mrb[0].mxu0
    %v424 = vadd.f32 %v322, %v423
    %425 = vdwg.mxu0
    %426 = vmatprep.subr.mxu0 %v60
    %427 = vmatpush1.msra.mxu0 %v59
    %428 = vmatprep.subr.mxu0 %v68
    %429 = vmatpush1.msra.mxu0 %v67
    %430 = vmatprep.subr.mxu0 %v76
    %431 = vmatpush1.msra.mxu0 %v75
    %432 = vmatprep.subr.mxu0 %v84
    %433 = vmatpush1.msra.mxu0 %v83
    %434 = vmatprep.subr.mxu0 %v92
    %435 = vmatpush1.msra.mxu0 %v91
    %436 = vmatprep.subr.mxu0 %v100
    %437 = vmatpush1.msra.mxu0 %v99
    %438 = vmatprep.subr.mxu0 %v108
    %439 = vmatpush1.msra.mxu0 %v107
    %440 = vmatprep.subr.mxu0 %v116
    %441 = vmatpush1.msra.mxu0 %v115
    %442 = vmatprep.subr.mxu0 %v124
    %443 = vmatpush1.msra.mxu0 %v123
    %444 = vmatprep.subr.mxu0 %v132
    %445 = vmatpush1.msra.mxu0 %v131
    %446 = vmatprep.subr.mxu0 %v140
    %447 = vmatpush1.msra.mxu0 %v139
    %448 = vmatprep.subr.mxu0 %v148
    %449 = vmatpush1.msra.mxu0 %v147
    %450 = vmatprep.subr.mxu0 %v156
    %451 = vmatpush1.msra.mxu0 %v155
    %452 = vmatprep.subr.mxu0 %v164
    %453 = vmatpush1.msra.mxu0 %v163
    %454 = vmatprep.subr.mxu0 %v172
    %455 = vmatpush1.msra.mxu0 %v171
    %456 = vmatprep.subr.mxu0 %v180
    %457 = vmatpush1.msra.mxu0 %v179
    %458 = vmatprep.subr.mxu0 %v188
    %459 = vmatpush1.msra.mxu0 %v187
    %460 = vmatprep.subr.mxu0 %v196
    %461 = vmatpush1.msra.mxu0 %v195
    %462 = vmatprep.subr.mxu0 %v204
    %463 = vmatpush1.msra.mxu0 %v203
    %464 = vmatprep.subr.mxu0 %v212
    %465 = vmatpush1.msra.mxu0 %v211
    %466 = vmatprep.subr.mxu0 %v220
    %467 = vmatpush1.msra.mxu0 %v219
    %468 = vmatprep.subr.mxu0 %v228
    %469 = vmatpush1.msra.mxu0 %v227
    %470 = vmatprep.subr.mxu0 %v236
    %471 = vmatpush1.msra.mxu0 %v235
    %472 = vmatprep.subr.mxu0 %v244
    %473 = vmatpush1.msra.mxu0 %v243
    %474 = vmatprep.subr.mxu0 %v252
    %475 = vmatpush1.msra.mxu0 %v251
    %476 = vmatprep.subr.mxu0 %v260
    %477 = vmatpush1.msra.mxu0 %v259
    %478 = vmatprep.subr.mxu0 %v268
    %479 = vmatpush1.msra.mxu0 %v267
    %480 = vmatprep.subr.mxu0 %v276
    %481 = vmatpush1.msra.mxu0 %v275
    %482 = vmatprep.subr.mxu0 %v284
    %483 = vmatpush1.msra.mxu0 %v283
    %484 = vmatprep.subr.mxu0 %v292
    %485 = vmatpush1.msra.mxu0 %v291
    %486 = vmatprep.subr.mxu0 %v300
    %487 = vmatpush1.msra.mxu0 %v299
    %488 = vmatprep.subr.mxu0 %v308
    %489 = vmatpush1.msra.mxu0 %v307
    %490 = vmatprep.mubr.f32.mxu0 %v56
    %491 = vmatmul.mubr.f32.gmra.mrb[0].mxu0 %v55
    %v492 = vpop.f32.mrb[0].mxu0
    %v493 = vadd.f32 %v326, %v492
    %v494 = vpop.f32.mrb[0].mxu0
    %v495 = vadd.f32 %v330, %v494
    %496 = vdwg.mxu0
    %497 = vmatprep.subr.mxu0 %v62
    %498 = vmatpush1.msra.mxu0 %v61
    %499 = vmatprep.subr.mxu0 %v70
    %500 = vmatpush1.msra.mxu0 %v69
    %501 = vmatprep.subr.mxu0 %v78
    %502 = vmatpush1.msra.mxu0 %v77
    %503 = vmatprep.subr.mxu0 %v86
    %504 = vmatpush1.msra.mxu0 %v85
    %505 = vmatprep.subr.mxu0 %v94
    %506 = vmatpush1.msra.mxu0 %v93
    %507 = vmatprep.subr.mxu0 %v102
    %508 = vmatpush1.msra.mxu0 %v101
    %509 = vmatprep.subr.mxu0 %v110
    %510 = vmatpush1.msra.mxu0 %v109
    %511 = vmatprep.subr.mxu0 %v118
    %512 = vmatpush1.msra.mxu0 %v117
    %513 = vmatprep.subr.mxu0 %v126
    %514 = vmatpush1.msra.mxu0 %v125
    %515 = vmatprep.subr.mxu0 %v134
    %516 = vmatpush1.msra.mxu0 %v133
    %517 = vmatprep.subr.mxu0 %v142
    %518 = vmatpush1.msra.mxu0 %v141
    %519 = vmatprep.subr.mxu0 %v150
    %520 = vmatpush1.msra.mxu0 %v149
    %521 = vmatprep.subr.mxu0 %v158
    %522 = vmatpush1.msra.mxu0 %v157
    %523 = vmatprep.subr.mxu0 %v166
    %524 = vmatpush1.msra.mxu0 %v165
    %525 = vmatprep.subr.mxu0 %v174
    %526 = vmatpush1.msra.mxu0 %v173
    %527 = vmatprep.subr.mxu0 %v182
    %528 = vmatpush1.msra.mxu0 %v181
    %529 = vmatprep.subr.mxu0 %v190
    %530 = vmatpush1.msra.mxu0 %v189
    %531 = vmatprep.subr.mxu0 %v198
    %532 = vmatpush1.msra.mxu0 %v197
    %533 = vmatprep.subr.mxu0 %v206
    %534 = vmatpush1.msra.mxu0 %v205
    %535 = vmatprep.subr.mxu0 %v214
    %536 = vmatpush1.msra.mxu0 %v213
    %537 = vmatprep.subr.mxu0 %v222
    %538 = vmatpush1.msra.mxu0 %v221
    %539 = vmatprep.subr.mxu0 %v230
    %540 = vmatpush1.msra.mxu0 %v229
    %541 = vmatprep.subr.mxu0 %v238
    %542 = vmatpush1.msra.mxu0 %v237
    %543 = vmatprep.subr.mxu0 %v246
    %544 = vmatpush1.msra.mxu0 %v245
    %545 = vmatprep.subr.mxu0 %v254
    %546 = vmatpush1.msra.mxu0 %v253
    %547 = vmatprep.subr.mxu0 %v262
    %548 = vmatpush1.msra.mxu0 %v261
    %549 = vmatprep.subr.mxu0 %v270
    %550 = vmatpush1.msra.mxu0 %v269
    %551 = vmatprep.subr.mxu0 %v278
    %552 = vmatpush1.msra.mxu0 %v277
    %553 = vmatprep.subr.mxu0 %v286
    %554 = vmatpush1.msra.mxu0 %v285
    %555 = vmatprep.subr.mxu0 %v294
    %556 = vmatpush1.msra.mxu0 %v293
    %557 = vmatprep.subr.mxu0 %v302
    %558 = vmatpush1.msra.mxu0 %v301
    %559 = vmatprep.subr.mxu0 %v310
    %560 = vmatpush1.msra.mxu0 %v309
    %561 = vmatprep.mubr.f32.mxu0 %v56
    %562 = vmatmul.mubr.f32.gmra.mrb[0].mxu0 %v55
    %v563 = vpop.f32.mrb[0].mxu0
    %v564 = vadd.f32 %v334, %v563
    %v565 = vpop.f32.mrb[0].mxu0
    %v566 = vadd.f32 %v338, %v565
    %567 = vdwg.mxu0
    %568 = vmatprep.subr.mxu0 %v64
    %569 = vmatpush1.msra.mxu0 %v63
    %570 = vmatprep.subr.mxu0 %v72
    %571 = vmatpush1.msra.mxu0 %v71
    %572 = vmatprep.subr.mxu0 %v80
    %573 = vmatpush1.msra.mxu0 %v79
    %574 = vmatprep.subr.mxu0 %v88
    %575 = vmatpush1.msra.mxu0 %v87
    %576 = vmatprep.subr.mxu0 %v96
    %577 = vmatpush1.msra.mxu0 %v95
    %578 = vmatprep.subr.mxu0 %v104
    %579 = vmatpush1.msra.mxu0 %v103
    %580 = vmatprep.subr.mxu0 %v112
    %581 = vmatpush1.msra.mxu0 %v111
    %582 = vmatprep.subr.mxu0 %v120
    %583 = vmatpush1.msra.mxu0 %v119
    %584 = vmatprep.subr.mxu0 %v128
    %585 = vmatpush1.msra.mxu0 %v127
    %586 = vmatprep.subr.mxu0 %v136
    %587 = vmatpush1.msra.mxu0 %v135
    %588 = vmatprep.subr.mxu0 %v144
    %589 = vmatpush1.msra.mxu0 %v143
    %590 = vmatprep.subr.mxu0 %v152
    %591 = vmatpush1.msra.mxu0 %v151
    %592 = vmatprep.subr.mxu0 %v160
    %593 = vmatpush1.msra.mxu0 %v159
    %594 = vmatprep.subr.mxu0 %v168
    %595 = vmatpush1.msra.mxu0 %v167
    %596 = vmatprep.subr.mxu0 %v176
    %597 = vmatpush1.msra.mxu0 %v175
    %598 = vmatprep.subr.mxu0 %v184
    %599 = vmatpush1.msra.mxu0 %v183
    %600 = vmatprep.subr.mxu0 %v192
    %601 = vmatpush1.msra.mxu0 %v191
    %602 = vmatprep.subr.mxu0 %v200
    %603 = vmatpush1.msra.mxu0 %v199
    %604 = vmatprep.subr.mxu0 %v208
    %605 = vmatpush1.msra.mxu0 %v207
    %606 = vmatprep.subr.mxu0 %v216
    %607 = vmatpush1.msra.mxu0 %v215
    %608 = vmatprep.subr.mxu0 %v224
    %609 = vmatpush1.msra.mxu0 %v223
    %610 = vmatprep.subr.mxu0 %v232
    %611 = vmatpush1.msra.mxu0 %v231
    %612 = vmatprep.subr.mxu0 %v240
    %613 = vmatpush1.msra.mxu0 %v239
    %614 = vmatprep.subr.mxu0 %v248
    %615 = vmatpush1.msra.mxu0 %v247
    %616 = vmatprep.subr.mxu0 %v256
    %617 = vmatpush1.msra.mxu0 %v255
    %618 = vmatprep.subr.mxu0 %v264
    %619 = vmatpush1.msra.mxu0 %v263
    %620 = vmatprep.subr.mxu0 %v272
    %621 = vmatpush1.msra.mxu0 %v271
    %622 = vmatprep.subr.mxu0 %v280
    %623 = vmatpush1.msra.mxu0 %v279
    %624 = vmatprep.subr.mxu0 %v288
    %625 = vmatpush1.msra.mxu0 %v287
    %626 = vmatprep.subr.mxu0 %v296
    %627 = vmatpush1.msra.mxu0 %v295
    %628 = vmatprep.subr.mxu0 %v304
    %629 = vmatpush1.msra.mxu0 %v303
    %630 = vmatprep.subr.mxu0 %v312
    %631 = vmatpush1.msra.mxu0 %v311
    %632 = vmatprep.mubr.f32.mxu0 %v56
    %633 = vmatmul.mubr.f32.gmra.mrb[0].mxu0 %v55
    %v634 = vpop.f32.mrb[0].mxu0
    %v635 = vadd.f32 %v342, %v634
    %v636 = vpop.f32.mrb[0].mxu0
    %v637 = vadd.f32 %v346, %v636
    %638 = vdwg.mxu0
    %v639 = vld [vmem:[#allocation2] sm:$0xff]
    %v640 = vld [vmem:[#allocation2 + $0x8] sm:$0xff]
    %v641 = vld [vmem:[#allocation2 + $0x10] sm:$0xff]
    %v642 = vld [vmem:[#allocation2 + $0x18] sm:$0xff]
    %v643 = vmul.f32 %v639, %v422
    %v644 = vmul.f32 %v640, %v424
    %v645 = vmul.f32 %v641, %v493
    %v646 = vmul.f32 %v642, %v495
    %v647 = vadd.f32 %v643, %v564
    %v648 = vadd.f32 %v644, %v566
    %v649 = vadd.f32 %v645, %v635
    %v650 = vadd.f32 %v646, %v637
    %651 = vst [vmem:[#allocation8] sm:$0xff] %v647
    %652 = vst [vmem:[#allocation8 + $0x8] sm:$0xff] %v648
    %653 = vst [vmem:[#allocation8 + $0x10] sm:$0xff] %v649
    %654 = vst [vmem:[#allocation8 + $0x18] sm:$0xff] %v650
    // Predicated region
    $region30: #{tpu_custom_call.1} parent=1 // pred_check
      _
    $region31: #{tpu_custom_call.1} parent=1 // pred_check_branch
      %656 = sbr.rel (0) target = $region33
    $region32: #{tpu_custom_call.1} parent=1 // pred_region
      %s658 = ssub.s32 512, 512
      %659 = vsyncadd [#allocation4], %s658
      %s661 = sshll.u32 [#allocation8], 4
      %s662 = int_to_ptr.vmem [resolvable:$true] %s661
      %664 = dma.vmem_to_hbm [thread:$0]  %s662, 512, %s4, [#allocation4]
    $region33: #{tpu_custom_call.1} parent=1 // pred_fallthru
      _
    // Predicated region
    $region34: #{tpu_custom_call.1} parent=1 // pred_check
      _
    $region35: #{tpu_custom_call.1} parent=1 // pred_check_branch
      %666 = sbr.rel (0) target = $region37
    $region36: #{tpu_custom_call.1} parent=1 // pred_region
      %667 = dma.done [#allocation4], 512
    $region37: #{tpu_custom_call.1} parent=1 // pred_fallthru
      _
    %668 = vsyncpa [#allocation3], 1
    %669 = vsyncpa [#allocation6], 1
    %670 = vsyncpa [#allocation4], 1

</llo_original>
